<compile_context>
chip_gen: v6e
topology: v6e:2x2x1
jax: 0.10.0
libtpu: 0.0.40
codegen_flags: <defaults>
</compile_context>

<pallas_src>
import jax
import jax.numpy as jnp
from jax.experimental import pallas as pl
from jax.experimental.pallas import tpu as pltpu


def _temporal_drop_kernel(mask_ref, emb_ref, x_ref, o_ref):
    # mask_ref: (1, L) int32   (nonzero where the time step is replaced)
    # emb_ref : (1, L) x.dtype (embedding tiled across the T time steps)
    # x_ref   : (rt, L)        a chunk of batch rows, lane-dense
    # o_ref   : (rt, L)
    o_ref[...] = jnp.where(mask_ref[...] != 0, emb_ref[...], x_ref[...])


def _row_tile(batch: int, bytes_per_row: int, target_bytes: int = 4 << 20) -> int:
    """Rows per block: ~target_bytes per block, multiple of 8.

    If that covers the whole batch (or the batch is smaller than 8), use the
    full batch extent (full-extent blocks are always layout-legal)."""
    rows = max(8, target_bytes // max(1, bytes_per_row))
    rows = (rows // 8) * 8
    if rows >= batch:
        return batch
    return rows


def temporal_drop_m(x: jax.Array, embedding: jax.Array, mask: jax.Array) -> jax.Array:
    """x: (B, T, D), embedding: (D,), mask: (T,) bool -> (B, T, D)."""
    B, T, D = x.shape
    L = T * D

    # Lane-dense 2D view of the problem.
    x2 = x.reshape(B, L)
    # Each time step's mask bit repeated across its D features -> (1, L).
    mask_row = jnp.repeat(mask.astype(jnp.int32), D).reshape(1, L)
    # Embedding tiled over the T time steps -> (1, L), same dtype as x.
    emb_row = jnp.tile(embedding.astype(x.dtype), T).reshape(1, L)

    rt = _row_tile(B, L * x2.dtype.itemsize)
    grid = (pl.cdiv(B, rt),)

    out2 = pl.pallas_call(
        _temporal_drop_kernel,
        out_shape=jax.ShapeDtypeStruct((B, L), x.dtype),
        grid=grid,
        in_specs=[
            pl.BlockSpec((1, L), lambda i: (0, 0)),    # mask row, shared across steps
            pl.BlockSpec((1, L), lambda i: (0, 0)),    # embedding row, shared
            pl.BlockSpec((rt, L), lambda i: (i, 0)),   # chunk of batch rows
        ],
        out_specs=pl.BlockSpec((rt, L), lambda i: (i, 0)),
        compiler_params=pltpu.CompilerParams(
            dimension_semantics=("parallel",),
            vmem_limit_bytes=48 * 1024 * 1024,
        ),
    )(mask_row, emb_row, x2)

    # TODO(synk): a write-only variant (input_output_aliases + scalar-prefetched
    # masked-step indices) could cut HBM traffic from read+write of the whole
    # tensor to writing only the ~p*T masked rows.
    return out2.reshape(B, T, D)


if __name__ == "__main__":
    # Small shapes consistent with the module: batch=2, seq(T)=8, dim(D)=32.
    B, T, D = 2, 8, 32
    p = 0.5  # nonzero p so both branches of the select are exercised

    key = jax.random.PRNGKey(0)
    k_emb, k_x, k_mask = jax.random.split(key, 3)

    # nn.Parameter(torch.rand(dim)) -> uniform [0, 1)
    embedding = jax.random.uniform(k_emb, (D,), dtype=jnp.float32)
    x = jax.random.normal(k_x, (B, T, D), dtype=jnp.float32)
    # torch.rand(x.shape[1]) < p
    mask = jax.random.uniform(k_mask, (T,), dtype=jnp.float32) < p

    out = temporal_drop_m(x, embedding, mask)
    out = jax.block_until_ready(out)

    # Pure-JAX reference check of the semantics.
    ref = jnp.where(mask[None, :, None], embedding[None, None, :], x)
    assert out.shape == (B, T, D)
    assert jnp.allclose(out, ref), "mismatch vs reference"

    print("KERNEL_OK")
</pallas_src>

<mosaic_0001>
module attributes {stable_mosaic.version = 11 : i64} {
  func.func @_temporal_drop_kernel(%arg0: i32, %arg1: memref<1x256xi32, #tpu.memory_space<vmem>>, %arg2: memref<1x256xf32, #tpu.memory_space<vmem>>, %arg3: memref<2x256xf32, #tpu.memory_space<vmem>>, %arg4: memref<2x256xf32, #tpu.memory_space<vmem>>) attributes {dimension_semantics = [#tpu.dimension_semantics<parallel>], iteration_bounds = array<i64: 1>, scalar_prefetch = 0 : i64, scratch_operands = 0 : i64, tpu.core_type = #tpu.core_type<tc>, window_params = [{pipeline_mode = #tpu.pipeline_mode<synchronous>, transform_indices = @transform_0, window_bounds = array<i64: 1, 256>}, {pipeline_mode = #tpu.pipeline_mode<synchronous>, transform_indices = @transform_1, window_bounds = array<i64: 1, 256>}, {transform_indices = @transform_2, window_bounds = array<i64: 2, 256>}, {transform_indices = @transform_3, window_bounds = array<i64: 2, 256>}]} {
    %c0 = arith.constant 0 : index
    %c0_0 = arith.constant 0 : index
    %0 = vector.load %arg1[%c0, %c0_0] : memref<1x256xi32, #tpu.memory_space<vmem>>, vector<1x256xi32>
    %c0_i32 = arith.constant 0 : i32
    %1 = vector.broadcast %c0_i32 : i32 to vector<1x256xi32>
    %2 = arith.cmpi ne, %0, %1 : vector<1x256xi32>
    %c0_1 = arith.constant 0 : index
    %c0_2 = arith.constant 0 : index
    %3 = vector.load %arg2[%c0_1, %c0_2] : memref<1x256xf32, #tpu.memory_space<vmem>>, vector<1x256xf32>
    %c0_3 = arith.constant 0 : index
    %c0_4 = arith.constant 0 : index
    %4 = vector.load %arg3[%c0_3, %c0_4] : memref<2x256xf32, #tpu.memory_space<vmem>>, vector<2x256xf32>
    %5 = vector.shape_cast %2 : vector<1x256xi1> to vector<1x256xi1>
    %6 = vector.broadcast %5 : vector<1x256xi1> to vector<2x256xi1>
    %7 = vector.shape_cast %3 : vector<1x256xf32> to vector<1x256xf32>
    %8 = vector.broadcast %7 : vector<1x256xf32> to vector<2x256xf32>
    %9 = arith.select %6, %8, %4 : vector<2x256xi1>, vector<2x256xf32>
    %c0_5 = arith.constant 0 : index
    %c0_6 = arith.constant 0 : index
    %10 = vector.load %arg4[%c0_5, %c0_6] : memref<2x256xf32, #tpu.memory_space<vmem>>, vector<2x256xf32>
    tpu.vector_store %arg4[%c0_5, %c0_6], %9 {strides = array<i32>} : memref<2x256xf32, #tpu.memory_space<vmem>>, vector<2x256xf32>,
    return
  }
  func.func @transform_0(%arg0: i32) -> (i32, i32) {
    %c0_i32 = arith.constant 0 : i32
    %c0_i32_0 = arith.constant 0 : i32
    %c0_i32_1 = arith.constant 0 : i32
    return %c0_i32, %c0_i32_0 : i32, i32
  }
  func.func @transform_1(%arg0: i32) -> (i32, i32) {
    %c0_i32 = arith.constant 0 : i32
    %c0_i32_0 = arith.constant 0 : i32
    %c0_i32_1 = arith.constant 0 : i32
    return %c0_i32, %c0_i32_0 : i32, i32
  }
  func.func @transform_2(%arg0: i32) -> (i32, i32) {
    %c0_i32 = arith.constant 0 : i32
    %c0_i32_0 = arith.constant 0 : i32
    return %arg0, %c0_i32 : i32, i32
  }
  func.func @transform_3(%arg0: i32) -> (i32, i32) {
    %c0_i32 = arith.constant 0 : i32
    %c0_i32_0 = arith.constant 0 : i32
    return %arg0, %c0_i32 : i32, i32
  }
}

</mosaic_0001>

<llo_original>
// kernel: tpu_custom_call.1
$region0: #{tpu_custom_call.1}
  #allocation0 [shape = 'u32[]', space=smem, size = 0x4, offset = 0x4, fixed_abs, tag = 'smem constant byte address 0x4 - core index']
  #allocation1 [shape = 'u32[144,128]{1,0:T(1,128)}', space=vmem, size = 0x12000, scoped, tag = 'internal scratch']
  %s0 = inlined_call_operand.hbm [shape: s32[1,256], index: 0, kind: input, shape index: {}]
  %s1 = inlined_call_operand.hbm [shape: f32[1,256], index: 1, kind: input, shape index: {}]
  %s2 = inlined_call_operand.hbm [shape: f32[2,256], index: 2, kind: input, shape index: {}]
  %s3 = inlined_call_operand.hbm [shape: f32[2,256], index: 3, kind: output, shape index: {}]
  %s4 = sld [smem:[#allocation0]]
  $region34: #{tpu_custom_call.1} parent=0
    _
  %s6 = ssub.s32 1, %s4
  %s7 = scalar_select 0, %s6, %s4
  $region1: #{tpu_custom_call.1} parent=0
    #allocation2 [shape = 'u8[1024]{0}', space=vmem, size = 0x400, scoped, tag = 'input window, operand 0, single buffered']
    #allocation3 [shape = 's32[1]{0}', space=sflag, size = 0x4, scoped, tag = 'scoped memory for tpu_custom_call.1']
    #allocation4 [shape = 's32[1]{0}', space=sflag, size = 0x4, scoped, tag = 'scoped memory for tpu_custom_call.1']
    #allocation5 [shape = 'u8[1024]{0}', space=vmem, size = 0x400, scoped, tag = 'input window, operand 1, single buffered']
    #allocation6 [shape = 's32[1]{0}', space=sflag, size = 0x4, scoped, tag = 'scoped memory for tpu_custom_call.1']
    #allocation7 [shape = 'u8[2048]{0}', space=vmem, size = 0x800, scoped, tag = 'input window, operand 2, single buffered']
    #allocation8 [shape = 'u8[2048]{0}', space=vmem, size = 0x800, scoped, tag = 'output window, operand 0, single buffered']
    %8 = vsyncpa [#allocation3], 0
    %9 = vsyncpa [#allocation6], 0
    %10 = vsyncpa [#allocation4], 0
    // Predicated region
    $region2: #{tpu_custom_call.1} parent=1 // pred_check
      _
    $region3: #{tpu_custom_call.1} parent=1 // pred_check_branch
      %12 = sbr.rel (0) target = $region5
    $region4: #{tpu_custom_call.1} parent=1 // pred_region
      %s14 = ssub.s32 32, 32
      %15 = vsyncadd [#allocation3], %s14
      %s17 = sshll.u32 [#allocation2], 4
      %s18 = int_to_ptr.vmem [resolvable:$true] %s17
      %20 = dma.hbm_to_vmem [thread:$0]  %s0, 32, %s18, [#allocation3]
    $region5: #{tpu_custom_call.1} parent=1 // pred_fallthru
      _
    // Predicated region
    $region6: #{tpu_custom_call.1} parent=1 // pred_check
      _
    $region7: #{tpu_custom_call.1} parent=1 // pred_check_branch
      %22 = sbr.rel (0) target = $region9
    $region8: #{tpu_custom_call.1} parent=1 // pred_region
      %s24 = ssub.s32 32, 32
      %25 = vsyncadd [#allocation6], %s24
      %s27 = sshll.u32 [#allocation5], 4
      %s28 = int_to_ptr.vmem [resolvable:$true] %s27
      %30 = dma.hbm_to_vmem [thread:$0]  %s1, 32, %s28, [#allocation6]
    $region9: #{tpu_custom_call.1} parent=1 // pred_fallthru
      _
    // Predicated region
    $region10: #{tpu_custom_call.1} parent=1 // pred_check
      _
    $region11: #{tpu_custom_call.1} parent=1 // pred_check_branch
      %32 = sbr.rel (0) target = $region13
    $region12: #{tpu_custom_call.1} parent=1 // pred_region
      %s34 = ssub.s32 64, 64
      %35 = vsyncadd [#allocation6], %s34
      %s37 = sshll.u32 [#allocation7], 4
      %s38 = int_to_ptr.vmem [resolvable:$true] %s37
      %40 = dma.hbm_to_vmem [thread:$0]  %s2, 64, %s38, [#allocation6]
    $region13: #{tpu_custom_call.1} parent=1 // pred_fallthru
      _
    // Predicated region
    $region14: #{tpu_custom_call.1} parent=1 // pred_check
      _
    $region15: #{tpu_custom_call.1} parent=1 // pred_check_branch
      %42 = sbr.rel (0) target = $region17
    $region16: #{tpu_custom_call.1} parent=1 // pred_region
      %43 = dma.done [#allocation3], 32
    $region17: #{tpu_custom_call.1} parent=1 // pred_fallthru
      _
    // Predicated region
    $region18: #{tpu_custom_call.1} parent=1 // pred_check
      _
    $region19: #{tpu_custom_call.1} parent=1 // pred_check_branch
      %45 = sbr.rel (0) target = $region21
    $region20: #{tpu_custom_call.1} parent=1 // pred_region
      %46 = dma.done [#allocation6], 32
    $region21: #{tpu_custom_call.1} parent=1 // pred_fallthru
      _
    // Predicated region
    $region22: #{tpu_custom_call.1} parent=1 // pred_check
      _
    $region23: #{tpu_custom_call.1} parent=1 // pred_check_branch
      %48 = sbr.rel (0) target = $region25
    $region24: #{tpu_custom_call.1} parent=1 // pred_region
      %49 = dma.done [#allocation6], 64
    $region25: #{tpu_custom_call.1} parent=1 // pred_fallthru
      _
    %v50 = vld [vmem:[#allocation2] sm:$0x3]
    %vm51 = vcmp.ne.s32.totalorder %v50, 0
    %v52 = vld [vmem:[#allocation5] sm:$0x3]
    %v53 = vld [vmem:[#allocation7] sm:$0xf]
    %v54 = vsel %vm51, 1, 0
    %v55 = vlaneseq
    %v56 = vshrl.u32 %v55, 7
    %v57 = vsub.s32 0, %v56
    %v58 = vrot.slane %v54, %v57
    %v59 = vlaneseq
    %v60 = vshrl.u32 %v59, 7
    %v61 = vsub.s32 1, %v60
    %v62 = vrot.slane %v54, %v61
    %vm63 = vcmp.eq.s32.totalorder %v58, 1
    %vm64 = vcmp.eq.s32.totalorder %v62, 1
    %v66 = vlaneseq
    %v67 = vshrl.u32 %v66, 7
    %v68 = vsub.s32 0, %v67
    %v69 = vrot.slane %v52, %v68
    %v70 = vlaneseq
    %v71 = vshrl.u32 %v70, 7
    %v72 = vsub.s32 1, %v71
    %v73 = vrot.slane %v52, %v72
    %v78 = vunpack.c.l.s4 1983009808
    %v79 = vunpack.c.0.s8 %v78
    %v80 = vlaneseq
    %v81 = vshrl.u32 %v80, 7
    %v82 = vsub.s32 %v79, %v81
    %v83 = vrot.slane %v53, %v82
    %v84 = vcombine.high %v83, %v83
    %v87 = vsel %vm63, %v69, %v83
    %v88 = vsel %vm64, %v73, %v84
    %v91 = vcombine.low %v87, %v88
    %v93 = vunpack.c.l.s4 1983009808
    %v94 = vunpack.c.0.s8 %v93
    %v95 = vlaneseq
    %v96 = vshrl.u32 %v95, 7
    %v97 = vsub.s32 %v94, %v96
    %v98 = vrot.slane %v91, %v97
    %100 = vst [vmem:[#allocation8] sm:$0xf] %v98
    // Predicated region
    $region26: #{tpu_custom_call.1} parent=1 // pred_check
      _
    $region27: #{tpu_custom_call.1} parent=1 // pred_check_branch
      %102 = sbr.rel (0) target = $region29
    $region28: #{tpu_custom_call.1} parent=1 // pred_region
      %s104 = ssub.s32 64, 64
      %105 = vsyncadd [#allocation4], %s104
      %s107 = sshll.u32 [#allocation8], 4
      %s108 = int_to_ptr.vmem [resolvable:$true] %s107
      %110 = dma.vmem_to_hbm [thread:$0]  %s108, 64, %s3, [#allocation4]
    $region29: #{tpu_custom_call.1} parent=1 // pred_fallthru
      _
    // Predicated region
    $region30: #{tpu_custom_call.1} parent=1 // pred_check
      _
    $region31: #{tpu_custom_call.1} parent=1 // pred_check_branch
      %112 = sbr.rel (0) target = $region33
    $region32: #{tpu_custom_call.1} parent=1 // pred_region
      %113 = dma.done [#allocation4], 64
    $region33: #{tpu_custom_call.1} parent=1 // pred_fallthru
      _
    %114 = vsyncpa [#allocation3], 1
    %115 = vsyncpa [#allocation6], 1
    %116 = vsyncpa [#allocation4], 1

</llo_original>
